<compile_context>
chip_gen: v5e
topology: v5e:2x2
jax: 0.10.0
libtpu: 0.0.40
codegen_flags: <defaults>
</compile_context>

<pallas_src>
import numpy as np
import jax
import jax.numpy as jnp
from jax.experimental import pallas as pl
from jax.experimental.pallas import tpu as pltpu


# ----------------------------- kernels ---------------------------------------
# Argument convention: row-tiled refs first, then (replicated) weight refs,
# then output refs.

def _res_identity_kernel(h_ref, x_ref, o_ref):
    o_ref[...] = (h_ref[...] + x_ref[...]).astype(o_ref.dtype)


def _res_linear_kernel(h_ref, x_ref, wt_ref, bt_ref, o_ref):
    xt = (jnp.dot(x_ref[...], wt_ref[...], preferred_element_type=jnp.float32)
          + bt_ref[...])
    o_ref[...] = (h_ref[...].astype(jnp.float32) + xt).astype(o_ref.dtype)


def _res_pair_identity_kernel(h_ref, x_ref, h2_ref, x2_ref, o1_ref, o2_ref):
    o1_ref[...] = (h_ref[...] + x_ref[...]).astype(o1_ref.dtype)
    o2_ref[...] = (h2_ref[...] + x2_ref[...]).astype(o2_ref.dtype)


def _res_pair_linear_kernel(h_ref, x_ref, h2_ref, x2_ref, wt_ref, bt_ref,
                            o1_ref, o2_ref):
    wt = wt_ref[...]
    bt = bt_ref[...]
    xt = jnp.dot(x_ref[...], wt, preferred_element_type=jnp.float32) + bt
    x2t = jnp.dot(x2_ref[...], wt, preferred_element_type=jnp.float32) + bt
    o1_ref[...] = (h_ref[...].astype(jnp.float32) + xt).astype(o1_ref.dtype)
    o2_ref[...] = (h2_ref[...].astype(jnp.float32) + x2t).astype(o2_ref.dtype)


def _dense_identity_kernel(h_ref, x_ref, o_ref):
    # Two direct stores split at the h/x column boundary -- no in-vreg
    # concatenate / cross-lane relayout.
    ch = h_ref.shape[-1]
    o_ref[:, :ch] = h_ref[...].astype(o_ref.dtype)
    o_ref[:, ch:] = x_ref[...].astype(o_ref.dtype)


def _dense_linear_kernel(h_ref, x_ref, wt_ref, bt_ref, o_ref):
    ch = h_ref.shape[-1]
    xt = (jnp.dot(x_ref[...], wt_ref[...], preferred_element_type=jnp.float32)
          + bt_ref[...])
    o_ref[:, :ch] = h_ref[...].astype(o_ref.dtype)
    o_ref[:, ch:] = xt.astype(o_ref.dtype)


def _dense_pair_identity_kernel(h_ref, x_ref, h2_ref, x2_ref, o1_ref, o2_ref):
    ch = h_ref.shape[-1]
    ch2 = h2_ref.shape[-1]
    o1_ref[:, :ch] = h_ref[...].astype(o1_ref.dtype)
    o1_ref[:, ch:] = x_ref[...].astype(o1_ref.dtype)
    o2_ref[:, :ch2] = h2_ref[...].astype(o2_ref.dtype)
    o2_ref[:, ch2:] = x2_ref[...].astype(o2_ref.dtype)


def _dense_pair_linear_kernel(h_ref, x_ref, h2_ref, x2_ref, wt_ref, bt_ref,
                              o1_ref, o2_ref):
    ch = h_ref.shape[-1]
    ch2 = h2_ref.shape[-1]
    wt = wt_ref[...]
    bt = bt_ref[...]
    xt = jnp.dot(x_ref[...], wt, preferred_element_type=jnp.float32) + bt
    x2t = jnp.dot(x2_ref[...], wt, preferred_element_type=jnp.float32) + bt
    o1_ref[:, :ch] = h_ref[...].astype(o1_ref.dtype)
    o1_ref[:, ch:] = xt.astype(o1_ref.dtype)
    o2_ref[:, :ch2] = h2_ref[...].astype(o2_ref.dtype)
    o2_ref[:, ch2:] = x2t.astype(o2_ref.dtype)


def _highway_identity_kernel(h_ref, x_ref, wg_ref, bg_ref, o_ref):
    xt = x_ref[...].astype(jnp.float32)
    g = jax.nn.sigmoid(
        jnp.dot(xt, wg_ref[...], preferred_element_type=jnp.float32) + bg_ref[...])
    o_ref[...] = (h_ref[...].astype(jnp.float32) * g
                  + xt * (1.0 - g)).astype(o_ref.dtype)


def _highway_linear_kernel(h_ref, x_ref, wt_ref, bt_ref, wgp_ref, bgp_ref, o_ref):
    # Gate weights are pre-folded through the transformer (wg' = wt@wg,
    # bg' = bt@wg + bg), so both matmuls below are independent.
    x = x_ref[...]
    xt = jnp.dot(x, wt_ref[...], preferred_element_type=jnp.float32) + bt_ref[...]
    g = jax.nn.sigmoid(
        jnp.dot(x, wgp_ref[...], preferred_element_type=jnp.float32) + bgp_ref[...])
    o_ref[...] = (h_ref[...].astype(jnp.float32) * g
                  + xt * (1.0 - g)).astype(o_ref.dtype)


def _highway_pair_identity_kernel(h_ref, x_ref, h2_ref, x2_ref,
                                  wg_ref, bg_ref, o1_ref, o2_ref):
    # Gate computed from the FIRST pair's x and shared (reference semantics).
    xt = x_ref[...].astype(jnp.float32)
    x2t = x2_ref[...].astype(jnp.float32)
    g = jax.nn.sigmoid(
        jnp.dot(xt, wg_ref[...], preferred_element_type=jnp.float32) + bg_ref[...])
    o1_ref[...] = (h_ref[...].astype(jnp.float32) * g
                   + xt * (1.0 - g)).astype(o1_ref.dtype)
    o2_ref[...] = (h2_ref[...].astype(jnp.float32) * g
                   + x2t * (1.0 - g)).astype(o2_ref.dtype)


def _highway_pair_linear_kernel(h_ref, x_ref, h2_ref, x2_ref,
                                wt_ref, bt_ref, wgp_ref, bgp_ref,
                                o1_ref, o2_ref):
    x = x_ref[...]
    x2 = x2_ref[...]
    wt = wt_ref[...]
    bt = bt_ref[...]
    xt = jnp.dot(x, wt, preferred_element_type=jnp.float32) + bt
    x2t = jnp.dot(x2, wt, preferred_element_type=jnp.float32) + bt
    g = jax.nn.sigmoid(
        jnp.dot(x, wgp_ref[...], preferred_element_type=jnp.float32) + bgp_ref[...])
    o1_ref[...] = (h_ref[...].astype(jnp.float32) * g
                   + xt * (1.0 - g)).astype(o1_ref.dtype)
    o2_ref[...] = (h2_ref[...].astype(jnp.float32) * g
                   + x2t * (1.0 - g)).astype(o2_ref.dtype)


# ----------------------------- generic launcher -------------------------------
def _round_up(n, m):
    return ((n + m - 1) // m) * m


def _vmem_capacity_bytes():
    try:
        return int(pltpu.get_tpu_info().vmem_capacity_bytes)
    except Exception:
        return 64 << 20          # conservative fallback (v7x per-TensorCore)


def _pick_tile(N, row_cols, out_cols, itemsize, tn_req):
    """Largest row tile that (a) keeps >= 2 grid steps (v7x megacore gets both
    TensorCores busy) and (b) keeps the double-buffered row tiles within
    ~half of physical VMEM (headroom for weights + compiler scratch)."""
    tn = max(8, min(_round_up(tn_req, 8), _round_up(pl.cdiv(N, 2), 8)))
    budget = _vmem_capacity_bytes() // 2
    per_row = 2 * (sum(row_cols) + sum(out_cols)) * itemsize   # x2: double-buffered
    while tn > 8 and tn * per_row > budget:
        tn = max(8, _round_up(tn // 2, 8))
    return tn


def _skip_call(kernel, row_inputs, weight_inputs, out_cols, out_dtype, tn=1024):
    """Row-tiled fused kernel launcher.

    row_inputs:    (N, Ci) arrays tiled along rows (grid axis, "parallel").
    weight_inputs: small arrays replicated to every tile (VMEM-resident).
    out_cols:      int or tuple of ints -> one (N, cols) output per entry.
    """
    N = row_inputs[0].shape[0]
    multi = isinstance(out_cols, (list, tuple))
    cols = tuple(out_cols) if multi else (out_cols,)
    row_cols = [a.shape[1] for a in row_inputs]
    itemsize = jnp.dtype(out_dtype).itemsize

    tn = _pick_tile(N, row_cols, cols, itemsize, tn)
    # Partial last block instead of pad+slice: reads of out-of-bounds rows are
    # junk (rows are independent, so it never pollutes valid rows) and the
    # writeback is masked -> no extra HBM round trips for N % tn != 0.
    grid = (pl.cdiv(N, tn),)

    in_specs = [pl.BlockSpec((tn, c), lambda i: (i, 0)) for c in row_cols]
    in_specs += [pl.BlockSpec(w.shape, lambda i: (0, 0)) for w in weight_inputs]

    out_shape = tuple(jax.ShapeDtypeStruct((N, c), out_dtype) for c in cols)
    out_specs = tuple(pl.BlockSpec((tn, c), lambda i: (i, 0)) for c in cols)
    if not multi:
        out_shape, out_specs = out_shape[0], out_specs[0]

    # Explicit VMEM budget: double-buffered row tiles + (double-buffered)
    # weights + headroom, clamped to physical capacity (64 MiB v7x, 128 MiB
    # v5e/v6e) and never below a 16 MiB floor.
    cap = _vmem_capacity_bytes()
    row_bytes = 2 * tn * (sum(row_cols) + sum(cols)) * itemsize
    w_bytes = sum(2 * int(np.prod(w.shape)) * w.dtype.itemsize
                  for w in weight_inputs)
    vmem_limit = int(min(cap, max(row_bytes + w_bytes + (4 << 20), 16 << 20)))

    res = pl.pallas_call(
        kernel,
        out_shape=out_shape,
        grid=grid,
        in_specs=in_specs,
        out_specs=out_specs,
        compiler_params=pltpu.CompilerParams(
            dimension_semantics=("parallel",),
            vmem_limit_bytes=vmem_limit),
    )(*row_inputs, *weight_inputs)

    return tuple(res) if multi else res


# ----------------------------- module wrapper ---------------------------------
class SkipConnection:
    """Pallas TPU port of the PyTorch SkipConnection module (forward only)."""

    def __init__(self, skip_connection, in_channels, out_channels,
                 key=None, dtype=jnp.float32):
        assert skip_connection in ('vanilla', 'res', 'dense', 'highway')
        self.skip_connection = skip_connection
        self.in_channels = in_channels
        self.out_channels = out_channels
        self.identity = (in_channels == out_channels)   # Identity transformer
        self.dtype = dtype                               # bf16 also supported
        key = jax.random.PRNGKey(42) if key is None else key
        k1, k2, k3, k4 = jax.random.split(key, 4)
        if not self.identity:
            b = 1.0 / float(np.sqrt(in_channels))
            # transformer Linear stored transposed: y = x @ wt + bt
            self.wt = jax.random.uniform(k1, (in_channels, out_channels), dtype, -b, b)
            self.bt = jax.random.uniform(k2, (1, out_channels), dtype, -b, b)
        if skip_connection == 'highway':
            b = 1.0 / float(np.sqrt(out_channels))
            self.wg = jax.random.uniform(k3, (out_channels, out_channels), dtype, -b, b)
            self.bg = jax.random.uniform(k4, (1, out_channels), dtype, -b, b)
            if not self.identity:
                # Pre-fold the gate Linear through the transformer Linear:
                #   sigmoid((x@wt+bt)@wg + bg) == sigmoid(x@(wt@wg) + (bt@wg+bg))
                wt32 = self.wt.astype(jnp.float32)
                bt32 = self.bt.astype(jnp.float32)
                wg32 = self.wg.astype(jnp.float32)
                self.wgp = jnp.dot(wt32, wg32,
                                   precision=jax.lax.Precision.HIGHEST).astype(dtype)
                self.bgp = (jnp.dot(bt32, wg32,
                                    precision=jax.lax.Precision.HIGHEST)
                            + self.bg.astype(jnp.float32)).astype(dtype)

    # ---- single (h, x) pair ----
    def _single(self, h, x, tn):
        mode = self.skip_connection
        if mode == 'vanilla':
            return h                                      # pure passthrough
        if mode == 'res':
            if self.identity:
                return _skip_call(_res_identity_kernel, [h, x], [],
                                  h.shape[1], h.dtype, tn)
            return _skip_call(_res_linear_kernel, [h, x], [self.wt, self.bt],
                              self.out_channels, h.dtype, tn)
        if mode == 'dense':
            if self.identity:
                return _skip_call(_dense_identity_kernel, [h, x], [],
                                  h.shape[1] + x.shape[1], h.dtype, tn)
            return _skip_call(_dense_linear_kernel, [h, x], [self.wt, self.bt],
                              h.shape[1] + self.out_channels, h.dtype, tn)
        # highway
        if self.identity:
            return _skip_call(_highway_identity_kernel, [h, x],
                              [self.wg, self.bg], self.out_channels, h.dtype, tn)
        return _skip_call(_highway_linear_kernel, [h, x],
                          [self.wt, self.bt, self.wgp, self.bgp],
                          self.out_channels, h.dtype, tn)

    def __call__(self, h_x, tn=1024):
        mode = self.skip_connection
        if isinstance(h_x, list):
            (h, x), (h2, x2) = h_x[0], h_x[1]
            if mode == 'vanilla':
                return (h, h2)
            rows = [h, x, h2, x2]                        # one fused launch
            if mode == 'res':
                if self.identity:
                    return _skip_call(_res_pair_identity_kernel, rows, [],
                                      (h.shape[1], h2.shape[1]), h.dtype, tn)
                return _skip_call(_res_pair_linear_kernel, rows,
                                  [self.wt, self.bt],
                                  (self.out_channels, self.out_channels),
                                  h.dtype, tn)
            if mode == 'dense':
                if self.identity:
                    return _skip_call(_dense_pair_identity_kernel, rows, [],
                                      (h.shape[1] + x.shape[1],
                                       h2.shape[1] + x2.shape[1]),
                                      h.dtype, tn)
                return _skip_call(_dense_pair_linear_kernel, rows,
                                  [self.wt, self.bt],
                                  (h.shape[1] + self.out_channels,
                                   h2.shape[1] + self.out_channels),
                                  h.dtype, tn)
            # highway: gate computed from the first pair's x, shared (as in ref)
            if self.identity:
                return _skip_call(_highway_pair_identity_kernel, rows,
                                  [self.wg, self.bg],
                                  (self.out_channels, self.out_channels),
                                  h.dtype, tn)
            return _skip_call(_highway_pair_linear_kernel, rows,
                              [self.wt, self.bt, self.wgp, self.bgp],
                              (self.out_channels, self.out_channels),
                              h.dtype, tn)
        h, x = h_x
        return self._single(h, x, tn)


# ----------------------------- pure-JAX reference -----------------------------
def _ref_forward(mod, h_x):
    def transform(x):
        return x if mod.identity else x @ mod.wt + mod.bt

    if isinstance(h_x, list):
        (h, x), (h2, x2) = h_x
        if mod.skip_connection == 'vanilla':
            return (h, h2)
        x = transform(x)
        x2 = transform(x2)
        if mod.skip_connection == 'res':
            return (h + x, h2 + x2)
        if mod.skip_connection == 'dense':
            return (jnp.concatenate([h, x], -1), jnp.concatenate([h2, x2], -1))
        g = jax.nn.sigmoid(x @ mod.wg + mod.bg)
        return (h * g + x * (1.0 - g), h2 * g + x2 * (1.0 - g))
    h, x = h_x
    if mod.skip_connection == 'vanilla':
        return h
    x = transform(x)
    if mod.skip_connection == 'res':
        return h + x
    if mod.skip_connection == 'dense':
        return jnp.concatenate([h, x], -1)
    g = jax.nn.sigmoid(x @ mod.wg + mod.bg)
    return h * g + x * (1.0 - g)


# ----------------------------- demo / self-test --------------------------------
if __name__ == "__main__":
    key = jax.random.PRNGKey(0)
    # N deliberately not a multiple of the tile (or even of 8) to exercise the
    # pad-free partial-last-block path.
    N, Cin, Cout = 500, 64, 128
    kh, kx, kh2, kx2 = jax.random.split(key, 4)

    h = jax.random.normal(kh, (N, Cout), jnp.float32)
    h2 = jax.random.normal(kh2, (N, Cout), jnp.float32)
    # Linear-transformer case (in_channels != out_channels)
    x = jax.random.normal(kx, (N, Cin), jnp.float32)
    x2 = jax.random.normal(kx2, (N, Cin), jnp.float32)
    # Identity-transformer case (in_channels == out_channels)
    xi = jax.random.normal(kx, (N, Cout), jnp.float32)
    x2i = jax.random.normal(kx2, (N, Cout), jnp.float32)

    tol = dict(rtol=2e-2, atol=2e-2)
    for mode in ('vanilla', 'res', 'dense', 'highway'):
        for ident in (True, False):
            cin = Cout if ident else Cin
            xs, x2s = (xi, x2i) if ident else (x, x2)
            mod = SkipConnection(mode, cin, Cout, key=jax.random.PRNGKey(1))

            # tuple input path
            got = mod((h, xs))
            jax.block_until_ready(got)
            ref = _ref_forward(mod, (h, xs))
            np.testing.assert_allclose(np.asarray(got), np.asarray(ref), **tol)

            # list-of-two-tuples input path (single fused launch)
            got2 = mod([(h, xs), (h2, x2s)])
            jax.block_until_ready(got2)
            ref2 = _ref_forward(mod, [(h, xs), (h2, x2s)])
            np.testing.assert_allclose(np.asarray(got2[0]), np.asarray(ref2[0]), **tol)
            np.testing.assert_allclose(np.asarray(got2[1]), np.asarray(ref2[1]), **tol)

    print("KERNEL_OK")
</pallas_src>

<mosaic_0001>
module attributes {stable_mosaic.version = 11 : i64} {
  func.func @_res_identity_kernel(%arg0: i32, %arg1: memref<256x128xf32, #tpu.memory_space<vmem>>, %arg2: memref<256x128xf32, #tpu.memory_space<vmem>>, %arg3: memref<256x128xf32, #tpu.memory_space<vmem>>) attributes {dimension_semantics = [#tpu.dimension_semantics<parallel>], iteration_bounds = array<i64: 2>, scalar_prefetch = 0 : i64, scratch_operands = 0 : i64, tpu.core_type = #tpu.core_type<tc>, window_params = [{transform_indices = @transform_0, window_bounds = array<i64: 256, 128>}, {transform_indices = @transform_1, window_bounds = array<i64: 256, 128>}, {transform_indices = @transform_2, window_bounds = array<i64: 256, 128>}]} {
    %c0 = arith.constant 0 : index
    %c0_0 = arith.constant 0 : index
    %0 = vector.load %arg1[%c0, %c0_0] : memref<256x128xf32, #tpu.memory_space<vmem>>, vector<256x128xf32>
    %c0_1 = arith.constant 0 : index
    %c0_2 = arith.constant 0 : index
    %1 = vector.load %arg2[%c0_1, %c0_2] : memref<256x128xf32, #tpu.memory_space<vmem>>, vector<256x128xf32>
    %2 = arith.addf %0, %1 : vector<256x128xf32>
    %c0_3 = arith.constant 0 : index
    %c0_4 = arith.constant 0 : index
    %3 = vector.load %arg3[%c0_3, %c0_4] : memref<256x128xf32, #tpu.memory_space<vmem>>, vector<256x128xf32>
    tpu.vector_store %arg3[%c0_3, %c0_4], %2 {strides = array<i32>} : memref<256x128xf32, #tpu.memory_space<vmem>>, vector<256x128xf32>,
    return
  }
  func.func @transform_0(%arg0: i32) -> (i32, i32) {
    %c0_i32 = arith.constant 0 : i32
    %c0_i32_0 = arith.constant 0 : i32
    return %arg0, %c0_i32 : i32, i32
  }
  func.func @transform_1(%arg0: i32) -> (i32, i32) {
    %c0_i32 = arith.constant 0 : i32
    %c0_i32_0 = arith.constant 0 : i32
    return %arg0, %c0_i32 : i32, i32
  }
  func.func @transform_2(%arg0: i32) -> (i32, i32) {
    %c0_i32 = arith.constant 0 : i32
    %c0_i32_0 = arith.constant 0 : i32
    return %arg0, %c0_i32 : i32, i32
  }
}

</mosaic_0001>

<llo_original>
// kernel: tpu_custom_call.1
$region0: #{tpu_custom_call.1}
  #allocation0 [shape = 'u32[]', space=smem, size = 0x4, offset = 0x4, fixed_abs, tag = 'smem constant byte address 0x4 - core index']
  #allocation1 [shape = 'u32[72,128]{1,0:T(1,128)}', space=vmem, size = 0x9000, scoped, tag = 'internal scratch']
  %s0 = inlined_call_operand.hbm [shape: f32[500,128], index: 0, kind: input, shape index: {}]
  %s1 = inlined_call_operand.hbm [shape: f32[500,128], index: 1, kind: input, shape index: {}]
  %s2 = inlined_call_operand.hbm [shape: f32[500,128], index: 2, kind: output, shape index: {}]
  %s3 = sld [smem:[#allocation0]]
  $region49: #{tpu_custom_call.1} parent=0
    _
  %s5 = ssub.s32 1, %s3
  %s6 = scalar_select 0, %s5, %s3
  $region1: #{tpu_custom_call.1} parent=0
    #allocation2 [shape = 'u8[262144]{0}', space=vmem, size = 0x40000, scoped, tag = 'input window, operand 0']
    #allocation3 [shape = 's32[2]{0}', space=sflag, size = 0x8, scoped, tag = 'scoped memory for tpu_custom_call.1']
    #allocation4 [shape = 's32[2]{0}', space=sflag, size = 0x8, scoped, tag = 'scoped memory for tpu_custom_call.1']
    #allocation5 [shape = 'u8[262144]{0}', space=vmem, size = 0x40000, scoped, tag = 'input window, operand 1']
    #allocation6 [shape = 's32[2]{0}', space=sflag, size = 0x8, scoped, tag = 'scoped memory for tpu_custom_call.1']
    #allocation7 [shape = 'u8[262144]{0}', space=vmem, size = 0x40000, scoped, tag = 'output window, operand 0']
    %7 = vsyncpa [#allocation3], 0
    %s8 = scalar_lea.sflag [#allocation3], 1
    %9 = vsyncpa %s8, 0
    %10 = vsyncpa [#allocation6], 0
    %s11 = scalar_lea.sflag [#allocation6], 1
    %12 = vsyncpa %s11, 0
    %13 = vsyncpa [#allocation4], 0
    %s14 = scalar_lea.sflag [#allocation4], 1
    %15 = vsyncpa %s14, 0
    loop: start=0, step=1, limit=4
    $region2: #{tpu_custom_call.1} parent=1 // loop_pre_header
      _
    $region3: #{tpu_custom_call.1} parent=1 // loop_header
      %s17 = sphi 0, %s21
      %p18 = scmp.ge.s32.totalorder %s17, 4
      %s27 = sphi 0, %s29
      %s30 = sphi 0, %s27
      %s31 = sphi 0, %s30
      %s47 = sphi 0, %s31
      %s53 = sphi 0, %s55
      %s56 = sphi 0, %s53
      %s57 = sphi 0, %s56
      %s73 = sphi 0, %s57
      %s79 = sphi 0, %s81
      %s82 = sphi 0, %s79
      %s83 = sphi 0, %s82
      %s99 = sphi 0, %s83
    $region4: #{tpu_custom_call.1} parent=1 // loop_header_branch
      %20 = sbr.rel (%p18) target = $region8
    $region5: #{tpu_custom_call.1} parent=1 // loop_body
      %s22 = ssub.s32 %s17, 1
      %s23 = ssub.s32 %s17, 2
      %s24 = sadd.s32 %s17, 1
      %s25 = ssub.s32 %s17, %s24
      %p26 = scmp.eq.s32.totalorder %s25, 0
      %s28 = sadd.s32 %s27, 1
      %s29 = scalar_select %p26, %s27, %s28
      %p32 = pneg %p26
      %p33 = scmp.eq.s32.totalorder %s17, 1
      %p34 = por %p32, %p33
      %p35 = scmp.ne.s32.totalorder %s27, %s30
      %p36 = scmp.eq.s32.totalorder %s17, 0
      %p37 = por %p35, %p36
      %p38 = scmp.ne.s32.totalorder %s27, %s30
      %p39 = scmp.eq.s32.totalorder %s22, 1
      %p40 = por %p38, %p39
      %p41 = scmp.ne.s32.totalorder %s30, %s31
      %p42 = scmp.eq.s32.totalorder %s22, 0
      %p43 = por %p41, %p42
      %p44 = scmp.ne.s32.totalorder %s30, %s31
      %p45 = scmp.eq.s32.totalorder %s23, 1
      %p46 = por %p44, %p45
      %p48 = scmp.ne.s32.totalorder %s31, %s47
      %p49 = scmp.eq.s32.totalorder %s23, 0
      %p50 = por %p48, %p49
      %s51 = ssub.s32 %s17, %s24
      %p52 = scmp.eq.s32.totalorder %s51, 0
      %s54 = sadd.s32 %s53, 1
      %s55 = scalar_select %p52, %s53, %s54
      %p58 = pneg %p52
      %p59 = scmp.eq.s32.totalorder %s17, 1
      %p60 = por %p58, %p59
      %p61 = scmp.ne.s32.totalorder %s53, %s56
      %p62 = scmp.eq.s32.totalorder %s17, 0
      %p63 = por %p61, %p62
      %p64 = scmp.ne.s32.totalorder %s53, %s56
      %p65 = scmp.eq.s32.totalorder %s22, 1
      %p66 = por %p64, %p65
      %p67 = scmp.ne.s32.totalorder %s56, %s57
      %p68 = scmp.eq.s32.totalorder %s22, 0
      %p69 = por %p67, %p68
      %p70 = scmp.ne.s32.totalorder %s56, %s57
      %p71 = scmp.eq.s32.totalorder %s23, 1
      %p72 = por %p70, %p71
      %p74 = scmp.ne.s32.totalorder %s57, %s73
      %p75 = scmp.eq.s32.totalorder %s23, 0
      %p76 = por %p74, %p75
      %s77 = ssub.s32 %s17, %s24
      %p78 = scmp.eq.s32.totalorder %s77, 0
      %s80 = sadd.s32 %s79, 1
      %s81 = scalar_select %p78, %s79, %s80
      %p84 = pneg %p78
      %p85 = scmp.eq.s32.totalorder %s17, 1
      %p86 = por %p84, %p85
      %p87 = scmp.ne.s32.totalorder %s79, %s82
      %p88 = scmp.eq.s32.totalorder %s17, 0
      %p89 = por %p87, %p88
      %p90 = scmp.ne.s32.totalorder %s79, %s82
      %p91 = scmp.eq.s32.totalorder %s22, 1
      %p92 = por %p90, %p91
      %p93 = scmp.ne.s32.totalorder %s82, %s83
      %p94 = scmp.eq.s32.totalorder %s22, 0
      %p95 = por %p93, %p94
      %p96 = scmp.ne.s32.totalorder %s82, %s83
      %p97 = scmp.eq.s32.totalorder %s23, 1
      %p98 = por %p96, %p97
      %p100 = scmp.ne.s32.totalorder %s83, %s99
      %p101 = scmp.eq.s32.totalorder %s23, 0
      %p102 = por %p100, %p101
      %p103 = scmp.le.s32.totalorder 1, %s17
      %p104 = scmp.lt.s32.totalorder %s17, 3
      %p105 = pnand %p103, %p104
      %p106 = pneg %p105
      // Predicated region
      $region9: #{tpu_custom_call.1} parent=5 // pred_check
        _
      $region10: #{tpu_custom_call.1} parent=5 // pred_check_branch
        %108 = sbr.rel (%p105) target = $region12
      $region11: #{tpu_custom_call.1} parent=5 // pred_region
        %s109 = ssub.s32 %s17, 1
      $region12: #{tpu_custom_call.1} parent=5 // pred_fallthru
        _
      %p110 = scmp.lt.s32.totalorder %s17, 2
      // Predicated region
      $region13: #{tpu_custom_call.1} parent=5 // pred_check
        %p111 = pneg %p110
      $region14: #{tpu_custom_call.1} parent=5 // pred_check_branch
        %113 = sbr.rel (%p111) target = $region16
      $region15: #{tpu_custom_call.1} parent=5 // pred_region
        // Predicated region
        $region17: #{tpu_custom_call.1} parent=15 // pred_check
          %p114 = pneg %p37
        $region18: #{tpu_custom_call.1} parent=15 // pred_check_branch
          %116 = sbr.rel (%p114) target = $region20
        $region19: #{tpu_custom_call.1} parent=15 // pred_region
          %s117 = sand.u32 %s27, 1
          %s118 = scalar_lea.sflag [#allocation3], %s117
          %s119 = sand.u32 %s27, 1
          %s120 = smul.addr %s119, 256
          %s121 = scalar_lea.vmem [#allocation2], %s120
          %s122 = smul.u32 32, %s17
          %s123 = ssub.s32 63, %s122
          %p124 = scmp.lt.s32.totalorder %s123, 32
          %s125 = scalar_select %p124, %s123, 32
          %s126 = smul.u32 8, %s125
          %s127 = ssub.s32 256, %s126
          %s128 = sshll.u32 %s127, 4
          %129 = vsyncadd %s118, %s128
          %p130 = scmp.ne.s32.totalorder 0, %s126
          %s131 = smul.addr %s122, 8
          %s132 = scalar_lea.hbm %s0, %s131
          %s133 = smul.u32 8, %s125
          %s134 = sshll.u32 %s132, 4
          %s135 = int_to_ptr.hbm [resolvable:$true] %s134
          %s136 = sshll.u32 %s121, 4
          %s137 = int_to_ptr.vmem [resolvable:$true] %s136
          %s138 = sshll.u32 %s133, 4
          %142 = dma.hbm_to_vmem [thread:$0]  (%p130), %s135, %s138, %s137, %s118, 128, 128, 8
        $region20: #{tpu_custom_call.1} parent=15 // pred_fallthru
          _
        // Predicated region
        $region21: #{tpu_custom_call.1} parent=15 // pred_check
          %p143 = pneg %p63
        $region22: #{tpu_custom_call.1} parent=15 // pred_check_branch
          %145 = sbr.rel (%p143) target = $region24
        $region23: #{tpu_custom_call.1} parent=15 // pred_region
          %s146 = sand.u32 %s53, 1
          %s147 = scalar_lea.sflag [#allocation6], %s146
          %s148 = sand.u32 %s53, 1
          %s149 = smul.addr %s148, 256
          %s150 = scalar_lea.vmem [#allocation5], %s149
          %s151 = smul.u32 32, %s17
          %s152 = ssub.s32 63, %s151
          %p153 = scmp.lt.s32.totalorder %s152, 32
          %s154 = scalar_select %p153, %s152, 32
          %s155 = smul.u32 8, %s154
          %s156 = ssub.s32 256, %s155
          %s157 = sshll.u32 %s156, 4
          %158 = vsyncadd %s147, %s157
          %p159 = scmp.ne.s32.totalorder 0, %s155
          %s160 = smul.addr %s151, 8
          %s161 = scalar_lea.hbm %s1, %s160
          %s162 = smul.u32 8, %s154
          %s163 = sshll.u32 %s161, 4
          %s164 = int_to_ptr.hbm [resolvable:$true] %s163
          %s165 = sshll.u32 %s150, 4
          %s166 = int_to_ptr.vmem [resolvable:$true] %s165
          %s167 = sshll.u32 %s162, 4
          %171 = dma.hbm_to_vmem [thread:$0]  (%p159), %s164, %s167, %s166, %s147, 128, 128, 8
        $region24: #{tpu_custom_call.1} parent=15 // pred_fallthru
          _
      $region16: #{tpu_custom_call.1} parent=5 // pred_fallthru
        _
      %p172 = scmp.le.s32.totalorder 1, %s17
      %p173 = scmp.lt.s32.totalorder %s17, 3
      %p174 = pnand %p172, %p173
      %p175 = pneg %p174
      // Predicated region
      $region25: #{tpu_custom_call.1} parent=5 // pred_check
        _
      $region26: #{tpu_custom_call.1} parent=5 // pred_check_branch
        %177 = sbr.rel (%p174) target = $region28
      $region27: #{tpu_custom_call.1} parent=5 // pred_region
        %s178 = ssub.s32 %s17, 1
        %s179 = sand.u32 %s30, 1
        %s180 = scalar_lea.sflag [#allocation3], %s179
        %s181 = sand.u32 %s30, 1
        %s182 = smul.addr %s181, 256
        %s183 = scalar_lea.vmem [#allocation2], %s182
        // Predicated region
        $region29: #{tpu_custom_call.1} parent=27 // pred_check
          %p184 = pneg %p43
        $region30: #{tpu_custom_call.1} parent=27 // pred_check_branch
          %186 = sbr.rel (%p184) target = $region32
        $region31: #{tpu_custom_call.1} parent=27 // pred_region
          %188 = dma.done %s180, 4096
        $region32: #{tpu_custom_call.1} parent=27 // pred_fallthru
          _
        %s189 = sand.u32 %s56, 1
        %s190 = scalar_lea.sflag [#allocation6], %s189
        %s191 = sand.u32 %s56, 1
        %s192 = smul.addr %s191, 256
        %s193 = scalar_lea.vmem [#allocation5], %s192
        // Predicated region
        $region33: #{tpu_custom_call.1} parent=27 // pred_check
          %p194 = pneg %p69
        $region34: #{tpu_custom_call.1} parent=27 // pred_check_branch
          %196 = sbr.rel (%p194) target = $region36
        $region35: #{tpu_custom_call.1} parent=27 // pred_region
          %198 = dma.done %s190, 4096
        $region36: #{tpu_custom_call.1} parent=27 // pred_fallthru
          _
        %s199 = sand.u32 %s30, 1
        %s200 = scalar_lea.sflag [#allocation3], %s199
        %s201 = sand.u32 %s30, 1
        %s202 = smul.addr %s201, 256
        %s203 = scalar_lea.vmem [#allocation2], %s202
        %p204 = pneg %p43
        %p205 = pneg %p40
        %s206 = sand.u32 %s56, 1
        %s207 = scalar_lea.sflag [#allocation6], %s206
        %s208 = sand.u32 %s56, 1
        %s209 = smul.addr %s208, 256
        %s210 = scalar_lea.vmem [#allocation5], %s209
        %p211 = pneg %p69
        %p212 = pneg %p66
        %p213 = pneg %p95
        %p214 = pneg %p92
        %s215 = sand.u32 %s82, 1
        %s216 = scalar_lea.sflag [#allocation4], %s215
        %s217 = sand.u32 %s82, 1
        %s218 = smul.addr %s217, 256
        %s219 = scalar_lea.vmem [#allocation7], %s218
        %s220 = smul.u32 32, %s22
        %s221 = ssub.s32 63, %s220
        %p222 = scmp.lt.s32.totalorder %s221, 32
        %s223 = scalar_select %p222, %s221, 32
        %s224 = smul.u32 8, %s223
        %s225 = smul.u32 32, %s22
        %s226 = ssub.s32 63, %s225
        %p227 = scmp.lt.s32.totalorder %s226, 32
        %s228 = scalar_select %p227, %s226, 32
        %s229 = smul.u32 8, %s228
        %s230 = smul.u32 32, %s22
        %s231 = ssub.s32 63, %s230
        %p232 = scmp.lt.s32.totalorder %s231, 32
        %s233 = scalar_select %p232, %s231, 32
        %s234 = smul.u32 8, %s233
        %v235 = vld [vmem:[%s183] sm:$0xff]
        %v236 = vld [vmem:[%s183 + $0x8] sm:$0xff]
        %v237 = vld [vmem:[%s183 + $0x10] sm:$0xff]
        %v238 = vld [vmem:[%s183 + $0x18] sm:$0xff]
        %v239 = vld [vmem:[%s183 + $0x20] sm:$0xff]
        %v240 = vld [vmem:[%s183 + $0x28] sm:$0xff]
        %v241 = vld [vmem:[%s183 + $0x30] sm:$0xff]
        %v242 = vld [vmem:[%s183 + $0x38] sm:$0xff]
        %v243 = vld [vmem:[%s183 + $0x40] sm:$0xff]
        %v244 = vld [vmem:[%s183 + $0x48] sm:$0xff]
        %v245 = vld [vmem:[%s183 + $0x50] sm:$0xff]
        %v246 = vld [vmem:[%s183 + $0x58] sm:$0xff]
        %v247 = vld [vmem:[%s183 + $0x60] sm:$0xff]
        %v248 = vld [vmem:[%s183 + $0x68] sm:$0xff]
        %v249 = vld [vmem:[%s183 + $0x70] sm:$0xff]
        %v250 = vld [vmem:[%s183 + $0x78] sm:$0xff]
        %v251 = vld [vmem:[%s183 + $0x80] sm:$0xff]
        %v252 = vld [vmem:[%s183 + $0x88] sm:$0xff]
        %v253 = vld [vmem:[%s183 + $0x90] sm:$0xff]
        %v254 = vld [vmem:[%s183 + $0x98] sm:$0xff]
        %v255 = vld [vmem:[%s183 + $0xa0] sm:$0xff]
        %v256 = vld [vmem:[%s183 + $0xa8] sm:$0xff]
        %v257 = vld [vmem:[%s183 + $0xb0] sm:$0xff]
        %v258 = vld [vmem:[%s183 + $0xb8] sm:$0xff]
        %v259 = vld [vmem:[%s183 + $0xc0] sm:$0xff]
        %v260 = vld [vmem:[%s183 + $0xc8] sm:$0xff]
        %v261 = vld [vmem:[%s183 + $0xd0] sm:$0xff]
        %v262 = vld [vmem:[%s183 + $0xd8] sm:$0xff]
        %v263 = vld [vmem:[%s183 + $0xe0] sm:$0xff]
        %v264 = vld [vmem:[%s183 + $0xe8] sm:$0xff]
        %v265 = vld [vmem:[%s183 + $0xf0] sm:$0xff]
        %v266 = vld [vmem:[%s183 + $0xf8] sm:$0xff]
        %v267 = vld [vmem:[%s193] sm:$0xff]
        %v268 = vld [vmem:[%s193 + $0x8] sm:$0xff]
        %v269 = vld [vmem:[%s193 + $0x10] sm:$0xff]
        %v270 = vld [vmem:[%s193 + $0x18] sm:$0xff]
        %v271 = vld [vmem:[%s193 + $0x20] sm:$0xff]
        %v272 = vld [vmem:[%s193 + $0x28] sm:$0xff]
        %v273 = vld [vmem:[%s193 + $0x30] sm:$0xff]
        %v274 = vld [vmem:[%s193 + $0x38] sm:$0xff]
        %v275 = vld [vmem:[%s193 + $0x40] sm:$0xff]
        %v276 = vld [vmem:[%s193 + $0x48] sm:$0xff]
        %v277 = vld [vmem:[%s193 + $0x50] sm:$0xff]
        %v278 = vld [vmem:[%s193 + $0x58] sm:$0xff]
        %v279 = vld [vmem:[%s193 + $0x60] sm:$0xff]
        %v280 = vld [vmem:[%s193 + $0x68] sm:$0xff]
        %v281 = vld [vmem:[%s193 + $0x70] sm:$0xff]
        %v282 = vld [vmem:[%s193 + $0x78] sm:$0xff]
        %v283 = vld [vmem:[%s193 + $0x80] sm:$0xff]
        %v284 = vld [vmem:[%s193 + $0x88] sm:$0xff]
        %v285 = vld [vmem:[%s193 + $0x90] sm:$0xff]
        %v286 = vld [vmem:[%s193 + $0x98] sm:$0xff]
        %v287 = vld [vmem:[%s193 + $0xa0] sm:$0xff]
        %v288 = vld [vmem:[%s193 + $0xa8] sm:$0xff]
        %v289 = vld [vmem:[%s193 + $0xb0] sm:$0xff]
        %v290 = vld [vmem:[%s193 + $0xb8] sm:$0xff]
        %v291 = vld [vmem:[%s193 + $0xc0] sm:$0xff]
        %v292 = vld [vmem:[%s193 + $0xc8] sm:$0xff]
        %v293 = vld [vmem:[%s193 + $0xd0] sm:$0xff]
        %v294 = vld [vmem:[%s193 + $0xd8] sm:$0xff]
        %v295 = vld [vmem:[%s193 + $0xe0] sm:$0xff]
        %v296 = vld [vmem:[%s193 + $0xe8] sm:$0xff]
        %v297 = vld [vmem:[%s193 + $0xf0] sm:$0xff]
        %v298 = vld [vmem:[%s193 + $0xf8] sm:$0xff]
        %v299 = vadd.f32 %v235, %v267
        %v300 = vadd.f32 %v236, %v268
        %v301 = vadd.f32 %v237, %v269
        %v302 = vadd.f32 %v238, %v270
        %v303 = vadd.f32 %v239, %v271
        %v304 = vadd.f32 %v240, %v272
        %v305 = vadd.f32 %v241, %v273
        %v306 = vadd.f32 %v242, %v274
        %v307 = vadd.f32 %v243, %v275
        %v308 = vadd.f32 %v244, %v276
        %v309 = vadd.f32 %v245, %v277
        %v310 = vadd.f32 %v246, %v278
        %v311 = vadd.f32 %v247, %v279
        %v312 = vadd.f32 %v248, %v280
        %v313 = vadd.f32 %v249, %v281
        %v314 = vadd.f32 %v250, %v282
        %v315 = vadd.f32 %v251, %v283
        %v316 = vadd.f32 %v252, %v284
        %v317 = vadd.f32 %v253, %v285
        %v318 = vadd.f32 %v254, %v286
        %v319 = vadd.f32 %v255, %v287
        %v320 = vadd.f32 %v256, %v288
        %v321 = vadd.f32 %v257, %v289
        %v322 = vadd.f32 %v258, %v290
        %v323 = vadd.f32 %v259, %v291
        %v324 = vadd.f32 %v260, %v292
        %v325 = vadd.f32 %v261, %v293
        %v326 = vadd.f32 %v262, %v294
        %v327 = vadd.f32 %v263, %v295
        %v328 = vadd.f32 %v264, %v296
        %v329 = vadd.f32 %v265, %v297
        %v330 = vadd.f32 %v266, %v298
        %331 = vst [vmem:[%s219] sm:$0xff] %v299
        %332 = vst [vmem:[%s219 + $0x8] sm:$0xff] %v300
        %333 = vst [vmem:[%s219 + $0x10] sm:$0xff] %v301
        %334 = vst [vmem:[%s219 + $0x18] sm:$0xff] %v302
        %335 = vst [vmem:[%s219 + $0x20] sm:$0xff] %v303
        %336 = vst [vmem:[%s219 + $0x28] sm:$0xff] %v304
        %337 = vst [vmem:[%s219 + $0x30] sm:$0xff] %v305
        %338 = vst [vmem:[%s219 + $0x38] sm:$0xff] %v306
        %339 = vst [vmem:[%s219 + $0x40] sm:$0xff] %v307
        %340 = vst [vmem:[%s219 + $0x48] sm:$0xff] %v308
        %341 = vst [vmem:[%s219 + $0x50] sm:$0xff] %v309
        %342 = vst [vmem:[%s219 + $0x58] sm:$0xff] %v310
        %343 = vst [vmem:[%s219 + $0x60] sm:$0xff] %v311
        %344 = vst [vmem:[%s219 + $0x68] sm:$0xff] %v312
        %345 = vst [vmem:[%s219 + $0x70] sm:$0xff] %v313
        %346 = vst [vmem:[%s219 + $0x78] sm:$0xff] %v314
        %347 = vst [vmem:[%s219 + $0x80] sm:$0xff] %v315
        %348 = vst [vmem:[%s219 + $0x88] sm:$0xff] %v316
        %349 = vst [vmem:[%s219 + $0x90] sm:$0xff] %v317
        %350 = vst [vmem:[%s219 + $0x98] sm:$0xff] %v318
        %351 = vst [vmem:[%s219 + $0xa0] sm:$0xff] %v319
        %352 = vst [vmem:[%s219 + $0xa8] sm:$0xff] %v320
        %353 = vst [vmem:[%s219 + $0xb0] sm:$0xff] %v321
        %354 = vst [vmem:[%s219 + $0xb8] sm:$0xff] %v322
        %355 = vst [vmem:[%s219 + $0xc0] sm:$0xff] %v323
        %356 = vst [vmem:[%s219 + $0xc8] sm:$0xff] %v324
        %357 = vst [vmem:[%s219 + $0xd0] sm:$0xff] %v325
        %358 = vst [vmem:[%s219 + $0xd8] sm:$0xff] %v326
        %359 = vst [vmem:[%s219 + $0xe0] sm:$0xff] %v327
        %360 = vst [vmem:[%s219 + $0xe8] sm:$0xff] %v328
        %361 = vst [vmem:[%s219 + $0xf0] sm:$0xff] %v329
        %362 = vst [vmem:[%s219 + $0xf8] sm:$0xff] %v330
        %s363 = sand.u32 %s82, 1
        %s364 = scalar_lea.sflag [#allocation4], %s363
        %s365 = sand.u32 %s82, 1
        %s366 = smul.addr %s365, 256
        %s367 = scalar_lea.vmem [#allocation7], %s366
        // Predicated region
        $region37: #{tpu_custom_call.1} parent=27 // pred_check
          %p368 = pneg %p92
        $region38: #{tpu_custom_call.1} parent=27 // pred_check_branch
          %370 = sbr.rel (%p368) target = $region40
        $region39: #{tpu_custom_call.1} parent=27 // pred_region
          %s371 = smul.u32 32, %s22
          %s372 = ssub.s32 63, %s371
          %p373 = scmp.lt.s32.totalorder %s372, 32
          %s374 = scalar_select %p373, %s372, 32
          %s375 = smul.u32 8, %s374
          %s376 = ssub.s32 256, %s375
          %s377 = sshll.u32 %s376, 4
          %378 = vsyncadd %s364, %s377
          %p379 = scmp.ne.s32.totalorder 0, %s375
          %s380 = smul.addr %s371, 8
          %s381 = scalar_lea.hbm %s2, %s380
          %s382 = smul.u32 8, %s374
          %s383 = sshll.u32 %s367, 4
          %s384 = int_to_ptr.vmem [resolvable:$true] %s383
          %s385 = sshll.u32 %s381, 4
          %s386 = int_to_ptr.hbm [resolvable:$true] %s385
          %s387 = sshll.u32 %s382, 4
          %391 = dma.vmem_to_hbm [thread:$0]  (%p379), %s384, %s387, %s386, %s364, 128, 128, 8
        $region40: #{tpu_custom_call.1} parent=27 // pred_fallthru
          _
      $region28: #{tpu_custom_call.1} parent=5 // pred_fallthru
        _
      %p392 = scmp.le.s32.totalorder 2, %s17
      // Predicated region
      $region41: #{tpu_custom_call.1} parent=5 // pred_check
        %p393 = pneg %p392
      $region42: #{tpu_custom_call.1} parent=5 // pred_check_branch
        %395 = sbr.rel (%p393) target = $region44
      $region43: #{tpu_custom_call.1} parent=5 // pred_region
        %s396 = ssub.s32 %s17, 2
        // Predicated region
        $region45: #{tpu_custom_call.1} parent=43 // pred_check
          %p397 = pneg %p98
        $region46: #{tpu_custom_call.1} parent=43 // pred_check_branch
          %399 = sbr.rel (%p397) target = $region48
        $region47: #{tpu_custom_call.1} parent=43 // pred_region
          %s400 = sand.u32 %s83, 1
          %s401 = scalar_lea.sflag [#allocation4], %s400
          %s402 = sand.u32 %s83, 1
          %s403 = smul.addr %s402, 256
          %s404 = scalar_lea.vmem [#allocation7], %s403
          %406 = dma.done %s401, 4096
        $region48: #{tpu_custom_call.1} parent=43 // pred_fallthru
          _
      $region44: #{tpu_custom_call.1} parent=5 // pred_fallthru
        _
    $region6: #{tpu_custom_call.1} parent=1 // loop_footer
      %s21 = sadd.s32 1, %s17
    $region7: #{tpu_custom_call.1} parent=1 // loop_footer_branch
      %16 = sbr.rel target = $region3
    $region8: #{tpu_custom_call.1} parent=1 // loop_exit
      _
    %407 = vsyncpa [#allocation3], 1
    %s408 = scalar_lea.sflag [#allocation3], 1
    %409 = vsyncpa %s408, 1
    %410 = vsyncpa [#allocation6], 1
    %s411 = scalar_lea.sflag [#allocation6], 1
    %412 = vsyncpa %s411, 1
    %413 = vsyncpa [#allocation4], 1
    %s414 = scalar_lea.sflag [#allocation4], 1
    %415 = vsyncpa %s414, 1

</llo_original>
